<compile_context>
chip_gen: v7x
topology: tpu7x:2x2x1
jax: 0.10.0
libtpu: 0.0.40
codegen_flags: <defaults>
</compile_context>

<pallas_src>
import functools

import jax
import jax.numpy as jnp
from jax.experimental import pallas as pl
from jax.experimental.pallas import tpu as pltpu

_LANES = 128
_ACC_ROWS = 64                 # accumulator rows: 8 independent f32-vreg add chains
_TARGET_BLOCK_BYTES = 4 << 20  # ~4 MiB streaming blocks (amortize ~0.35us/step,
                               # 2x double-buffered fits every scoped-VMEM default)
_XLA_FASTPATH_BYTES = 1 << 20  # tiny inputs: fused XLA beats kernel launch overhead


def _round_up(a, m):
    return ((a + m - 1) // m) * m


def _num_parallel_splits():
    # The leading "parallel" grid axis only pays off on multi-TensorCore chips
    # (v7x has 2 TCs). On single-TC v5e/v6e it just adds overhead, so use 1.
    try:
        kind = jax.devices()[0].device_kind.lower()
    except Exception:  # pragma: no cover - defensive
        return 1
    return 2 if "v7" in kind else 1


def _fold(v, row_tile):
    # (row_tile, 128) f32 -> (64, 128): sublane-folding partial sum.
    # 8 independent per-vreg chains of row_tile//64 adds each (VPU only);
    # the expensive cross-lane reduce is deferred to the tiny XLA epilogue.
    return v.reshape(row_tile // _ACC_ROWS, _ACC_ROWS, _LANES).sum(axis=0)


def _hinge_kernel(x_ref, o_ref, *, row_tile, tiles_per_split, total_tiles, rows):
    c = pl.program_id(0)          # parallel split (per-TensorCore shard on v7x)
    i = pl.program_id(1)          # sequential reduction step within the split
    t = c * tiles_per_split + i   # logical tile index

    # Output block is the resident accumulator; zero it at the start of a split.
    @pl.when(i == 0)
    def _init():
        o_ref[...] = jnp.zeros_like(o_ref)

    # Hot interior path: fully-covered tile, no masking (sub/max/add only).
    @pl.when(t < total_tiles - 1)
    def _interior():
        v = jnp.maximum(1.0 - x_ref[...].astype(jnp.float32), 0.0)
        o_ref[0] += _fold(v, row_tile)

    # Boundary tile: mask rows past the logical end. Row-granular masking keeps
    # the comparison int32-safe for arbitrarily large tensors (rows = n // 128).
    @pl.when(t == total_tiles - 1)
    def _boundary():
        v = jnp.maximum(1.0 - x_ref[...].astype(jnp.float32), 0.0)
        start_row = t * row_tile
        row_ids = start_row + jax.lax.broadcasted_iota(
            jnp.int32, (row_tile, _LANES), 0)
        v = jnp.where(row_ids < rows, v, 0.0)
        o_ref[0] += _fold(v, row_tile)

    # t > total_tiles - 1 (clamped duplicate tiles on the last split): skipped.


def hinge_neg_loss(x, y=None, *, force_kernel=False, block_rows=None):
    """mean(relu(1 - x)) as an f32 scalar. `y` is accepted and ignored, matching
    the PyTorch module's forward signature."""
    del y
    n = x.size
    itemsize = jnp.dtype(x.dtype).itemsize
    flat = jnp.ravel(x)          # native dtype in HBM; widened to f32 in-kernel

    rows = n // _LANES           # 128-aligned prefix rows handled by the kernel
    tail = n - rows * _LANES     # <=127 leftover elements handled in XLA epilogue

    # Small-input fast path (and degenerate n < 128 case).
    if rows == 0 or (n * itemsize < _XLA_FASTPATH_BYTES and not force_kernel):
        hinge = jnp.maximum(1.0 - flat.astype(jnp.float32), 0.0)
        return jnp.sum(hinge) / jnp.float32(n)

    # 128-aligned prefix as a (rows, 128) view. When n % 128 == 0 (common case)
    # this is a pure bitcast reshape; otherwise only the prefix is materialized
    # (no full-tensor concatenate/pad copy).
    x2d = flat[: rows * _LANES].reshape(rows, _LANES)

    # Constant-byte tiles: ~4 MiB per block regardless of dtype.
    if block_rows is None:
        row_budget = (_TARGET_BLOCK_BYTES // (_LANES * itemsize))
    else:
        row_budget = block_rows
    row_budget = max(_ACC_ROWS, (row_budget // _ACC_ROWS) * _ACC_ROWS)
    row_tile = min(row_budget, _round_up(rows, _ACC_ROWS))

    total_tiles = pl.cdiv(rows, row_tile)
    num_splits = min(_num_parallel_splits(), total_tiles)
    tiles_per_split = pl.cdiv(total_tiles, num_splits)

    kernel = functools.partial(
        _hinge_kernel, row_tile=row_tile, tiles_per_split=tiles_per_split,
        total_tiles=total_tiles, rows=rows)

    def in_map(c, i):
        # Clamp so the DMA never indexes past the array; any clamped duplicate
        # tile is skipped inside the kernel (no accumulate).
        return (jnp.minimum(c * tiles_per_split + i, total_tiles - 1), 0)

    out_bytes = num_splits * _ACC_ROWS * _LANES * 4
    partials = pl.pallas_call(
        kernel,
        out_shape=jax.ShapeDtypeStruct((num_splits, _ACC_ROWS, _LANES),
                                       jnp.float32),
        grid_spec=pltpu.PrefetchScalarGridSpec(
            num_scalar_prefetch=0,
            grid=(num_splits, tiles_per_split),
            in_specs=[pl.BlockSpec((row_tile, _LANES), in_map)],
            out_specs=pl.BlockSpec((1, _ACC_ROWS, _LANES),
                                   lambda c, i: (c, 0, 0)),
        ),
        compiler_params=pltpu.CompilerParams(
            dimension_semantics=("parallel", "arbitrary")),
        cost_estimate=pl.CostEstimate(
            flops=3 * rows * _LANES,
            transcendentals=0,
            bytes_accessed=rows * _LANES * itemsize + out_bytes),
    )(x2d)

    # Tiny epilogue: cross-lane reduce of (num_splits, 64, 128) partials, the
    # <=127-element tail, and the final normalization — all in plain XLA.
    total = jnp.sum(partials)
    if tail:
        tail_v = flat[rows * _LANES:]
        total = total + jnp.sum(jnp.maximum(1.0 - tail_v.astype(jnp.float32), 0.0))
    return total / jnp.float32(n)


if __name__ == "__main__":
    key = jax.random.PRNGKey(0)
    kx, ky = jax.random.split(key)

    def ref_loss(a):
        return jnp.mean(jnp.maximum(1.0 - a.astype(jnp.float32), 0.0))

    # 1) Module-sized small input (GAN critic output style): XLA fast path.
    x = jax.random.normal(kx, (2, 4, 16, 16), dtype=jnp.float32)
    y = jax.random.normal(ky, (2, 4, 16, 16), dtype=jnp.float32)
    out = jax.block_until_ready(hinge_neg_loss(x, y))
    assert jnp.allclose(out, ref_loss(x), atol=1e-6, rtol=1e-5), (out, ref_loss(x))

    # 2) Force the Pallas kernel with a small block so we exercise interior
    #    tiles, the masked boundary tile, and the unaligned <128-element tail.
    x2 = jax.random.normal(kx, (2, 4, 129, 130), dtype=jnp.float32)
    out2 = jax.block_until_ready(
        hinge_neg_loss(x2, None, force_kernel=True, block_rows=64))
    assert jnp.allclose(out2, ref_loss(x2), atol=1e-6, rtol=1e-5), (out2, ref_loss(x2))

    # 3) Default production tiling on the kernel path with a bf16 input
    #    (constant-byte block sizing, single partial boundary tile).
    x3 = jax.random.normal(ky, (2, 4, 129, 130), dtype=jnp.bfloat16)
    out3 = jax.block_until_ready(hinge_neg_loss(x3, None, force_kernel=True))
    assert jnp.allclose(out3, ref_loss(x3), atol=1e-5, rtol=1e-4), (out3, ref_loss(x3))

    print("KERNEL_OK")
</pallas_src>

<mosaic_0001>
module attributes {stable_mosaic.version = 11 : i64} {
  func.func @_hinge_kernel(%arg0: i32, %arg1: i32, %arg2: memref<64x128xf32, #tpu.memory_space<vmem>>, %arg3: memref<1x64x128xf32, #tpu.memory_space<vmem>>) attributes {dimension_semantics = [#tpu.dimension_semantics<parallel>, #tpu.dimension_semantics<arbitrary>], iteration_bounds = array<i64: 1, 17>, scalar_prefetch = 0 : i64, scratch_operands = 0 : i64, tpu.core_type = #tpu.core_type<tc>, window_params = [{transform_indices = @transform_0, window_bounds = array<i64: 64, 128>}, {transform_indices = @transform_1, window_bounds = array<i64: 1, 64, 128>}]} {
    %c17_i32 = arith.constant 17 : i32
    %0 = arith.muli %arg0, %c17_i32 : i32
    %1 = arith.addi %0, %arg1 : i32
    %c0_i32 = arith.constant 0 : i32
    %2 = arith.cmpi eq, %arg1, %c0_i32 : i32
    %3 = arith.extui %2 : i1 to i32
    %c0_i32_0 = arith.constant 0 : i32
    %4 = arith.cmpi ne, %3, %c0_i32_0 : i32
    scf.if %4 {
      %cst = arith.constant 0.000000e+00 : f32
      %11 = vector.broadcast %cst : f32 to vector<1x64x128xf32>
      %c0 = arith.constant 0 : index
      %c0_4 = arith.constant 0 : index
      %c0_5 = arith.constant 0 : index
      %12 = vector.load %arg3[%c0, %c0_4, %c0_5] : memref<1x64x128xf32, #tpu.memory_space<vmem>>, vector<1x64x128xf32>
      tpu.vector_store %arg3[%c0, %c0_4, %c0_5], %11 {strides = array<i32>} : memref<1x64x128xf32, #tpu.memory_space<vmem>>, vector<1x64x128xf32>,
    } else {
    }
    %c16_i32 = arith.constant 16 : i32
    %5 = arith.cmpi slt, %1, %c16_i32 : i32
    %6 = arith.extui %5 : i1 to i32
    %c0_i32_1 = arith.constant 0 : i32
    %7 = arith.cmpi ne, %6, %c0_i32_1 : i32
    scf.if %7 {
      %c0 = arith.constant 0 : index
      %c0_4 = arith.constant 0 : index
      %11 = vector.load %arg2[%c0, %c0_4] : memref<64x128xf32, #tpu.memory_space<vmem>>, vector<64x128xf32>
      %cst = arith.constant 1.000000e+00 : f32
      %12 = vector.broadcast %cst : f32 to vector<64x128xf32>
      %13 = arith.subf %12, %11 : vector<64x128xf32>
      %cst_5 = arith.constant 0.000000e+00 : f32
      %14 = vector.broadcast %cst_5 : f32 to vector<64x128xf32>
      %15 = arith.maximumf %13, %14 : vector<64x128xf32>
      %c0_6 = arith.constant 0 : index
      %c0_7 = arith.constant 0 : index
      %c0_8 = arith.constant 0 : index
      %16 = vector.load %arg3[%c0_6, %c0_7, %c0_8] : memref<1x64x128xf32, #tpu.memory_space<vmem>>, vector<1x64x128xf32>
      %17 = vector.shape_cast %16 : vector<1x64x128xf32> to vector<64x128xf32>
      %18 = vector.shape_cast %15 : vector<64x128xf32> to vector<1x64x128xf32>
      %cst_9 = arith.constant dense<0.000000e+00> : vector<64x128xf32>
      %19 = vector.multi_reduction <add>, %18, %cst_9 [0] : vector<1x64x128xf32> to vector<64x128xf32>
      %20 = arith.addf %17, %19 : vector<64x128xf32>
      %c0_10 = arith.constant 0 : index
      %c0_11 = arith.constant 0 : index
      %c0_12 = arith.constant 0 : index
      %21 = vector.load %arg3[%c0_10, %c0_11, %c0_12] : memref<1x64x128xf32, #tpu.memory_space<vmem>>, vector<1x64x128xf32>
      %22 = vector.shape_cast %21 : vector<1x64x128xf32> to vector<64x128xf32>
      %23 = vector.shape_cast %20 : vector<64x128xf32> to vector<1x64x128xf32>
      tpu.vector_store %arg3[%c0_10, %c0_11, %c0_12], %23 {strides = array<i32>} : memref<1x64x128xf32, #tpu.memory_space<vmem>>, vector<1x64x128xf32>,
    } else {
    }
    %c16_i32_2 = arith.constant 16 : i32
    %8 = arith.cmpi eq, %1, %c16_i32_2 : i32
    %9 = arith.extui %8 : i1 to i32
    %c0_i32_3 = arith.constant 0 : i32
    %10 = arith.cmpi ne, %9, %c0_i32_3 : i32
    scf.if %10 {
      %c0 = arith.constant 0 : index
      %c0_4 = arith.constant 0 : index
      %11 = vector.load %arg2[%c0, %c0_4] : memref<64x128xf32, #tpu.memory_space<vmem>>, vector<64x128xf32>
      %cst = arith.constant 1.000000e+00 : f32
      %12 = vector.broadcast %cst : f32 to vector<64x128xf32>
      %13 = arith.subf %12, %11 : vector<64x128xf32>
      %cst_5 = arith.constant 0.000000e+00 : f32
      %14 = vector.broadcast %cst_5 : f32 to vector<64x128xf32>
      %15 = arith.maximumf %13, %14 : vector<64x128xf32>
      %c64_i32 = arith.constant 64 : i32
      %16 = arith.muli %1, %c64_i32 : i32
      %17 = tpu.iota {dimensions = array<i32: 0>} : vector<64x128xi32>
      %18 = vector.broadcast %16 : i32 to vector<64x128xi32>
      %19 = arith.addi %18, %17 : vector<64x128xi32>
      %c1048_i32 = arith.constant 1048 : i32
      %20 = vector.broadcast %c1048_i32 : i32 to vector<64x128xi32>
      %21 = arith.cmpi slt, %19, %20 : vector<64x128xi32>
      %cst_6 = arith.constant 0.000000e+00 : f32
      %22 = vector.broadcast %cst_6 : f32 to vector<64x128xf32>
      %23 = arith.select %21, %15, %22 : vector<64x128xi1>, vector<64x128xf32>
      %c0_7 = arith.constant 0 : index
      %c0_8 = arith.constant 0 : index
      %c0_9 = arith.constant 0 : index
      %24 = vector.load %arg3[%c0_7, %c0_8, %c0_9] : memref<1x64x128xf32, #tpu.memory_space<vmem>>, vector<1x64x128xf32>
      %25 = vector.shape_cast %24 : vector<1x64x128xf32> to vector<64x128xf32>
      %26 = vector.shape_cast %23 : vector<64x128xf32> to vector<1x64x128xf32>
      %cst_10 = arith.constant dense<0.000000e+00> : vector<64x128xf32>
      %27 = vector.multi_reduction <add>, %26, %cst_10 [0] : vector<1x64x128xf32> to vector<64x128xf32>
      %28 = arith.addf %25, %27 : vector<64x128xf32>
      %c0_11 = arith.constant 0 : index
      %c0_12 = arith.constant 0 : index
      %c0_13 = arith.constant 0 : index
      %29 = vector.load %arg3[%c0_11, %c0_12, %c0_13] : memref<1x64x128xf32, #tpu.memory_space<vmem>>, vector<1x64x128xf32>
      %30 = vector.shape_cast %29 : vector<1x64x128xf32> to vector<64x128xf32>
      %31 = vector.shape_cast %28 : vector<64x128xf32> to vector<1x64x128xf32>
      tpu.vector_store %arg3[%c0_11, %c0_12, %c0_13], %31 {strides = array<i32>} : memref<1x64x128xf32, #tpu.memory_space<vmem>>, vector<1x64x128xf32>,
    } else {
    }
    return
  }
  func.func @transform_0(%arg0: i32, %arg1: i32) -> (i32, i32) {
    %c17_i32 = arith.constant 17 : i32
    %0 = arith.muli %arg0, %c17_i32 : i32
    %1 = arith.addi %0, %arg1 : i32
    %c16_i32 = arith.constant 16 : i32
    %2 = arith.minsi %1, %c16_i32 : i32
    %c0_i32 = arith.constant 0 : i32
    %c0_i32_0 = arith.constant 0 : i32
    return %2, %c0_i32 : i32, i32
  }
  func.func @transform_1(%arg0: i32, %arg1: i32) -> (i32, i32, i32) {
    %c0_i32 = arith.constant 0 : i32
    %c0_i32_0 = arith.constant 0 : i32
    %c0_i32_1 = arith.constant 0 : i32
    return %arg0, %c0_i32, %c0_i32_0 : i32, i32, i32
  }
}

</mosaic_0001>

<llo_original>
// kernel: tpu_custom_call.1
$region0: #{tpu_custom_call.1}
  #allocation0 [shape = 'u32[]', space=smem, size = 0x4, offset = 0x4, fixed_abs, tag = 'smem constant byte address 0x4 - core index']
  #allocation1 [shape = 'u32[144,128]{1,0:T(1,128)}', space=vmem, size = 0x12000, scoped, tag = 'internal scratch']
  %s0 = inlined_call_operand.hbm [shape: f32[1048,128], index: 0, kind: input, shape index: {}]
  %s1 = inlined_call_operand.hbm [shape: f32[1,64,128], index: 1, kind: output, shape index: {}]
  %s2 = sld [smem:[#allocation0]]
  $region53: #{tpu_custom_call.1} parent=0
    _
  %s4 = ssub.s32 1, %s2
  %s5 = scalar_select 0, %s4, %s2
  $region1: #{tpu_custom_call.1} parent=0
    #allocation2 [shape = 'u8[65536]{0}', space=vmem, size = 0x10000, scoped, tag = 'input window, operand 0']
    #allocation3 [shape = 's32[2]{0}', space=sflag, size = 0x8, scoped, tag = 'scoped memory for tpu_custom_call.1']
    #allocation4 [shape = 's32[2]{0}', space=sflag, size = 0x8, scoped, tag = 'scoped memory for tpu_custom_call.1']
    #allocation5 [shape = 'u8[32768]{0}', space=vmem, size = 0x8000, scoped, tag = 'output window, operand 0, single buffered']
    %6 = vsyncpa [#allocation3], 0
    %s7 = scalar_lea.sflag [#allocation3], 1
    %8 = vsyncpa %s7, 0
    %9 = vsyncpa [#allocation4], 0
    loop: start=0, step=1, limit=19
    $region2: #{tpu_custom_call.1} parent=1 // loop_pre_header
      _
    $region3: #{tpu_custom_call.1} parent=1 // loop_header
      %s11 = sphi 0, %s15
      %p12 = scmp.ge.s32.totalorder %s11, 19
      %s18 = sphi 0, %s30
      %s19 = sphi 0, %s26
      %s20 = sphi 0, %s18
      %s21 = sphi 0, %s19
      %s22 = sphi 0, %s20
      %s23 = sphi 0, %s21
      %s41 = sphi 0, %s43
      %s44 = sphi 0, %s41
      %s45 = sphi 0, %s44
      %s61 = sphi 0, %s45
      %s67 = sphi 0, %s69
      %s70 = sphi 0, %s67
      %s71 = sphi 0, %s70
      %s87 = sphi 0, %s71
    $region4: #{tpu_custom_call.1} parent=1 // loop_header_branch
      %14 = sbr.rel (%p12) target = $region8
    $region5: #{tpu_custom_call.1} parent=1 // loop_body
      %s16 = ssub.s32 %s11, 1
      %s17 = ssub.s32 %s11, 2
      %s24 = sadd.s32 1, %s19
      %p25 = scmp.ge.s32.totalorder %s24, 17
      %s26 = scalar_select %p25, 0, %s24
      %s27 = sadd.s32 1, %s18
      %s28 = scalar_select %p25, %s27, %s18
      %p29 = scmp.ge.s32.totalorder %s28, 1
      %s30 = scalar_select %p29, 0, %s28
      %s31 = smul.u32 %s18, 17
      %s32 = sadd.s32 %s31, %s19
      %p33 = scmp.lt.s32.totalorder %s32, 16
      %s34 = scalar_select %p33, %s32, 16
      %s35 = smul.u32 %s30, 17
      %s36 = sadd.s32 %s35, %s26
      %p37 = scmp.lt.s32.totalorder %s36, 16
      %s38 = scalar_select %p37, %s36, 16
      %s39 = ssub.s32 %s34, %s38
      %p40 = scmp.eq.s32.totalorder %s39, 0
      %s42 = sadd.s32 %s41, 1
      %s43 = scalar_select %p40, %s41, %s42
      %p46 = pneg %p40
      %p47 = scmp.eq.s32.totalorder %s11, 16
      %p48 = por %p46, %p47
      %p49 = scmp.ne.s32.totalorder %s41, %s44
      %p50 = scmp.eq.s32.totalorder %s11, 0
      %p51 = por %p49, %p50
      %p52 = scmp.ne.s32.totalorder %s41, %s44
      %p53 = scmp.eq.s32.totalorder %s16, 16
      %p54 = por %p52, %p53
      %p55 = scmp.ne.s32.totalorder %s44, %s45
      %p56 = scmp.eq.s32.totalorder %s16, 0
      %p57 = por %p55, %p56
      %p58 = scmp.ne.s32.totalorder %s44, %s45
      %p59 = scmp.eq.s32.totalorder %s17, 16
      %p60 = por %p58, %p59
      %p62 = scmp.ne.s32.totalorder %s45, %s61
      %p63 = scmp.eq.s32.totalorder %s17, 0
      %p64 = por %p62, %p63
      %s65 = ssub.s32 %s18, %s30
      %p66 = scmp.eq.s32.totalorder %s65, 0
      %s68 = sadd.s32 %s67, 1
      %s69 = scalar_select %p66, %s67, %s68
      %p72 = pneg %p66
      %p73 = scmp.eq.s32.totalorder %s11, 16
      %p74 = por %p72, %p73
      %p75 = scmp.ne.s32.totalorder %s67, %s70
      %p76 = scmp.eq.s32.totalorder %s11, 0
      %p77 = por %p75, %p76
      %p78 = scmp.ne.s32.totalorder %s67, %s70
      %p79 = scmp.eq.s32.totalorder %s16, 16
      %p80 = por %p78, %p79
      %p81 = scmp.ne.s32.totalorder %s70, %s71
      %p82 = scmp.eq.s32.totalorder %s16, 0
      %p83 = por %p81, %p82
      %p84 = scmp.ne.s32.totalorder %s70, %s71
      %p85 = scmp.eq.s32.totalorder %s17, 16
      %p86 = por %p84, %p85
      %p88 = scmp.ne.s32.totalorder %s71, %s87
      %p89 = scmp.eq.s32.totalorder %s17, 0
      %p90 = por %p88, %p89
      %p91 = scmp.le.s32.totalorder 1, %s11
      %p92 = scmp.lt.s32.totalorder %s11, 18
      %p93 = pnand %p91, %p92
      %p94 = pneg %p93
      // Predicated region
      $region9: #{tpu_custom_call.1} parent=5 // pred_check
        _
      $region10: #{tpu_custom_call.1} parent=5 // pred_check_branch
        %96 = sbr.rel (%p93) target = $region12
      $region11: #{tpu_custom_call.1} parent=5 // pred_region
        %s97 = ssub.s32 %s11, 1
      $region12: #{tpu_custom_call.1} parent=5 // pred_fallthru
        _
      %p98 = scmp.lt.s32.totalorder %s11, 17
      // Predicated region
      $region13: #{tpu_custom_call.1} parent=5 // pred_check
        %p99 = pneg %p98
      $region14: #{tpu_custom_call.1} parent=5 // pred_check_branch
        %101 = sbr.rel (%p99) target = $region16
      $region15: #{tpu_custom_call.1} parent=5 // pred_region
        // Predicated region
        $region17: #{tpu_custom_call.1} parent=15 // pred_check
          %p102 = pneg %p51
        $region18: #{tpu_custom_call.1} parent=15 // pred_check_branch
          %104 = sbr.rel (%p102) target = $region20
        $region19: #{tpu_custom_call.1} parent=15 // pred_region
          %s105 = sand.u32 %s41, 1
          %s106 = scalar_lea.sflag [#allocation3], %s105
          %s107 = sand.u32 %s41, 1
          %s108 = smul.addr %s107, 64
          %s109 = scalar_lea.vmem [#allocation2], %s108
          %s110 = smul.u32 %s18, 17
          %s111 = sadd.s32 %s110, %s19
          %p112 = scmp.lt.s32.totalorder %s111, 16
          %s113 = scalar_select %p112, %s111, 16
          %s114 = smul.u32 8, %s113
          %s115 = ssub.s32 131, %s114
          %p116 = scmp.lt.s32.totalorder %s115, 8
          %s117 = scalar_select %p116, %s115, 8
          %s118 = smul.u32 128, %s117
          %s120 = ssub.s32 1024, %s118
          %121 = vsyncadd %s106, %s120
          %p122 = scmp.ne.s32.totalorder 0, %s118
          %s123 = smul.addr %s114, 128
          %s124 = scalar_lea.hbm %s0, %s123
          %s125 = smul.u32 8, %s117
          %s126 = sshll.u32 %s109, 4
          %s127 = int_to_ptr.vmem [resolvable:$true] %s126
          %s128 = sshll.u32 %s125, 4
          %132 = dma.hbm_to_vmem [thread:$0]  (%p122), %s124, %s128, %s127, %s106, 128, 128, 8
        $region20: #{tpu_custom_call.1} parent=15 // pred_fallthru
          _
      $region16: #{tpu_custom_call.1} parent=5 // pred_fallthru
        _
      %p133 = scmp.le.s32.totalorder 1, %s11
      %p134 = scmp.lt.s32.totalorder %s11, 18
      %p135 = pnand %p133, %p134
      %p136 = pneg %p135
      // Predicated region
      $region21: #{tpu_custom_call.1} parent=5 // pred_check
        _
      $region22: #{tpu_custom_call.1} parent=5 // pred_check_branch
        %138 = sbr.rel (%p135) target = $region24
      $region23: #{tpu_custom_call.1} parent=5 // pred_region
        %s139 = ssub.s32 %s11, 1
        %s140 = sand.u32 %s44, 1
        %s141 = scalar_lea.sflag [#allocation3], %s140
        %s142 = sand.u32 %s44, 1
        %s143 = smul.addr %s142, 64
        %s144 = scalar_lea.vmem [#allocation2], %s143
        // Predicated region
        $region25: #{tpu_custom_call.1} parent=23 // pred_check
          %p145 = pneg %p57
        $region26: #{tpu_custom_call.1} parent=23 // pred_check_branch
          %147 = sbr.rel (%p145) target = $region28
        $region27: #{tpu_custom_call.1} parent=23 // pred_region
          %148 = dma.done %s141, 1024
        $region28: #{tpu_custom_call.1} parent=23 // pred_fallthru
          _
        %s149 = sand.u32 %s44, 1
        %s150 = scalar_lea.sflag [#allocation3], %s149
        %s151 = sand.u32 %s44, 1
        %s152 = smul.addr %s151, 64
        %s153 = scalar_lea.vmem [#allocation2], %s152
        %p154 = pneg %p57
        %p155 = pneg %p54
        %p156 = pneg %p83
        %p157 = pneg %p80
        %s158 = smul.u32 %s20, 17
        %s159 = sadd.s32 %s158, %s21
        %p160 = scmp.lt.s32.totalorder %s159, 16
        %s161 = scalar_select %p160, %s159, 16
        %s162 = smul.u32 8, %s161
        %s163 = ssub.s32 131, %s162
        %p164 = scmp.lt.s32.totalorder %s163, 8
        %s165 = scalar_select %p164, %s163, 8
        %s166 = smul.u32 128, %s165
        %s167 = smul.u32 %s20, 17
        %s168 = sadd.s32 %s167, %s21
        %p169 = scmp.eq.s32.totalorder %s21, 0
        // Predicated region
        $region29: #{tpu_custom_call.1} parent=23 // pred_check
          %p170 = pneg %p169
        $region30: #{tpu_custom_call.1} parent=23 // pred_check_branch
          %172 = sbr.rel (%p170) target = $region32
        $region31: #{tpu_custom_call.1} parent=23 // pred_region
          %173 = vst [vmem:[#allocation5] sm:$0xff] 0.0
          %174 = vst [vmem:[#allocation5 + $0x8] sm:$0xff] 0.0
          %175 = vst [vmem:[#allocation5 + $0x10] sm:$0xff] 0.0
          %176 = vst [vmem:[#allocation5 + $0x18] sm:$0xff] 0.0
          %177 = vst [vmem:[#allocation5 + $0x20] sm:$0xff] 0.0
          %178 = vst [vmem:[#allocation5 + $0x28] sm:$0xff] 0.0
          %179 = vst [vmem:[#allocation5 + $0x30] sm:$0xff] 0.0
          %180 = vst [vmem:[#allocation5 + $0x38] sm:$0xff] 0.0
        $region32: #{tpu_custom_call.1} parent=23 // pred_fallthru
          _
        %p181 = scmp.lt.s32.totalorder %s168, 16
        // Predicated region
        $region33: #{tpu_custom_call.1} parent=23 // pred_check
          %p182 = pneg %p181
        $region34: #{tpu_custom_call.1} parent=23 // pred_check_branch
          %184 = sbr.rel (%p182) target = $region36
        $region35: #{tpu_custom_call.1} parent=23 // pred_region
          %v185 = vld [vmem:[%s144] sm:$0xff]
          %v186 = vld [vmem:[%s144 + $0x8] sm:$0xff]
          %v187 = vld [vmem:[%s144 + $0x10] sm:$0xff]
          %v188 = vld [vmem:[%s144 + $0x18] sm:$0xff]
          %v189 = vld [vmem:[%s144 + $0x20] sm:$0xff]
          %v190 = vld [vmem:[%s144 + $0x28] sm:$0xff]
          %v191 = vld [vmem:[%s144 + $0x30] sm:$0xff]
          %v192 = vld [vmem:[%s144 + $0x38] sm:$0xff]
          %v193 = vsub.f32 1.0, %v185
          %v194 = vsub.f32 1.0, %v186
          %v195 = vsub.f32 1.0, %v187
          %v196 = vsub.f32 1.0, %v188
          %v197 = vsub.f32 1.0, %v189
          %v198 = vsub.f32 1.0, %v190
          %v199 = vsub.f32 1.0, %v191
          %v200 = vsub.f32 1.0, %v192
          %v201 = vmax.f32 %v193, 0.0
          %v202 = vmax.f32 %v194, 0.0
          %v203 = vmax.f32 %v195, 0.0
          %v204 = vmax.f32 %v196, 0.0
          %v205 = vmax.f32 %v197, 0.0
          %v206 = vmax.f32 %v198, 0.0
          %v207 = vmax.f32 %v199, 0.0
          %v208 = vmax.f32 %v200, 0.0
          %v209 = vld [vmem:[#allocation5] sm:$0xff]
          %v210 = vld [vmem:[#allocation5 + $0x8] sm:$0xff]
          %v211 = vld [vmem:[#allocation5 + $0x10] sm:$0xff]
          %v212 = vld [vmem:[#allocation5 + $0x18] sm:$0xff]
          %v213 = vld [vmem:[#allocation5 + $0x20] sm:$0xff]
          %v214 = vld [vmem:[#allocation5 + $0x28] sm:$0xff]
          %v215 = vld [vmem:[#allocation5 + $0x30] sm:$0xff]
          %v216 = vld [vmem:[#allocation5 + $0x38] sm:$0xff]
          %v217 = vadd.f32 %v201, 0.0
          %v218 = vadd.f32 %v202, 0.0
          %v219 = vadd.f32 %v203, 0.0
          %v220 = vadd.f32 %v204, 0.0
          %v221 = vadd.f32 %v205, 0.0
          %v222 = vadd.f32 %v206, 0.0
          %v223 = vadd.f32 %v207, 0.0
          %v224 = vadd.f32 %v208, 0.0
          %v225 = vadd.f32 %v209, %v217
          %v226 = vadd.f32 %v210, %v218
          %v227 = vadd.f32 %v211, %v219
          %v228 = vadd.f32 %v212, %v220
          %v229 = vadd.f32 %v213, %v221
          %v230 = vadd.f32 %v214, %v222
          %v231 = vadd.f32 %v215, %v223
          %v232 = vadd.f32 %v216, %v224
          %233 = vst [vmem:[#allocation5] sm:$0xff] %v225
          %234 = vst [vmem:[#allocation5 + $0x8] sm:$0xff] %v226
          %235 = vst [vmem:[#allocation5 + $0x10] sm:$0xff] %v227
          %236 = vst [vmem:[#allocation5 + $0x18] sm:$0xff] %v228
          %237 = vst [vmem:[#allocation5 + $0x20] sm:$0xff] %v229
          %238 = vst [vmem:[#allocation5 + $0x28] sm:$0xff] %v230
          %239 = vst [vmem:[#allocation5 + $0x30] sm:$0xff] %v231
          %240 = vst [vmem:[#allocation5 + $0x38] sm:$0xff] %v232
        $region36: #{tpu_custom_call.1} parent=23 // pred_fallthru
          _
        %p241 = scmp.eq.s32.totalorder %s168, 16
        // Predicated region
        $region37: #{tpu_custom_call.1} parent=23 // pred_check
          %p242 = pneg %p241
        $region38: #{tpu_custom_call.1} parent=23 // pred_check_branch
          %244 = sbr.rel (%p242) target = $region40
        $region39: #{tpu_custom_call.1} parent=23 // pred_region
          %v245 = vld [vmem:[%s144] sm:$0xff]
          %v246 = vld [vmem:[%s144 + $0x8] sm:$0xff]
          %v247 = vld [vmem:[%s144 + $0x10] sm:$0xff]
          %v248 = vld [vmem:[%s144 + $0x18] sm:$0xff]
          %v249 = vld [vmem:[%s144 + $0x20] sm:$0xff]
          %v250 = vld [vmem:[%s144 + $0x28] sm:$0xff]
          %v251 = vld [vmem:[%s144 + $0x30] sm:$0xff]
          %v252 = vld [vmem:[%s144 + $0x38] sm:$0xff]
          %v253 = vsub.f32 1.0, %v245
          %v254 = vsub.f32 1.0, %v246
          %v255 = vsub.f32 1.0, %v247
          %v256 = vsub.f32 1.0, %v248
          %v257 = vsub.f32 1.0, %v249
          %v258 = vsub.f32 1.0, %v250
          %v259 = vsub.f32 1.0, %v251
          %v260 = vsub.f32 1.0, %v252
          %v261 = vmax.f32 %v253, 0.0
          %v262 = vmax.f32 %v254, 0.0
          %v263 = vmax.f32 %v255, 0.0
          %v264 = vmax.f32 %v256, 0.0
          %v265 = vmax.f32 %v257, 0.0
          %v266 = vmax.f32 %v258, 0.0
          %v267 = vmax.f32 %v259, 0.0
          %v268 = vmax.f32 %v260, 0.0
          %s269 = smul.u32 %s168, 64
          %v270 = vlaneseq
          %v271 = vshrl.u32 %v270, 7
          %v272 = vadd.s32 %v271, 8
          %v273 = vadd.s32 %v271, 16
          %v274 = vadd.s32 %v271, 24
          %v275 = vadd.s32 %v271, 32
          %v276 = vadd.s32 %v271, 40
          %v277 = vadd.s32 %v271, 48
          %v278 = vadd.s32 %v271, 56
          %v279 = vstv %s269
          %v280 = vadd.s32 %v279, %v271
          %v281 = vadd.s32 %v279, %v272
          %v282 = vadd.s32 %v279, %v273
          %v283 = vadd.s32 %v279, %v274
          %v284 = vadd.s32 %v279, %v275
          %v285 = vadd.s32 %v279, %v276
          %v286 = vadd.s32 %v279, %v277
          %v287 = vadd.s32 %v279, %v278
          %vm288 = vcmp.lt.s32.totalorder %v280, 1048
          %vm289 = vcmp.lt.s32.totalorder %v281, 1048
          %vm290 = vcmp.lt.s32.totalorder %v282, 1048
          %vm291 = vcmp.lt.s32.totalorder %v283, 1048
          %vm292 = vcmp.lt.s32.totalorder %v284, 1048
          %vm293 = vcmp.lt.s32.totalorder %v285, 1048
          %vm294 = vcmp.lt.s32.totalorder %v286, 1048
          %vm295 = vcmp.lt.s32.totalorder %v287, 1048
          %v296 = vsel %vm288, %v261, 0.0
          %v297 = vsel %vm289, %v262, 0.0
          %v298 = vsel %vm290, %v263, 0.0
          %v299 = vsel %vm291, %v264, 0.0
          %v300 = vsel %vm292, %v265, 0.0
          %v301 = vsel %vm293, %v266, 0.0
          %v302 = vsel %vm294, %v267, 0.0
          %v303 = vsel %vm295, %v268, 0.0
          %v304 = vld [vmem:[#allocation5] sm:$0xff]
          %v305 = vld [vmem:[#allocation5 + $0x8] sm:$0xff]
          %v306 = vld [vmem:[#allocation5 + $0x10] sm:$0xff]
          %v307 = vld [vmem:[#allocation5 + $0x18] sm:$0xff]
          %v308 = vld [vmem:[#allocation5 + $0x20] sm:$0xff]
          %v309 = vld [vmem:[#allocation5 + $0x28] sm:$0xff]
          %v310 = vld [vmem:[#allocation5 + $0x30] sm:$0xff]
          %v311 = vld [vmem:[#allocation5 + $0x38] sm:$0xff]
          %v312 = vadd.f32 %v296, 0.0
          %v313 = vadd.f32 %v297, 0.0
          %v314 = vadd.f32 %v298, 0.0
          %v315 = vadd.f32 %v299, 0.0
          %v316 = vadd.f32 %v300, 0.0
          %v317 = vadd.f32 %v301, 0.0
          %v318 = vadd.f32 %v302, 0.0
          %v319 = vadd.f32 %v303, 0.0
          %v320 = vadd.f32 %v304, %v312
          %v321 = vadd.f32 %v305, %v313
          %v322 = vadd.f32 %v306, %v314
          %v323 = vadd.f32 %v307, %v315
          %v324 = vadd.f32 %v308, %v316
          %v325 = vadd.f32 %v309, %v317
          %v326 = vadd.f32 %v310, %v318
          %v327 = vadd.f32 %v311, %v319
          %328 = vst [vmem:[#allocation5] sm:$0xff] %v320
          %329 = vst [vmem:[#allocation5 + $0x8] sm:$0xff] %v321
          %330 = vst [vmem:[#allocation5 + $0x10] sm:$0xff] %v322
          %331 = vst [vmem:[#allocation5 + $0x18] sm:$0xff] %v323
          %332 = vst [vmem:[#allocation5 + $0x20] sm:$0xff] %v324
          %333 = vst [vmem:[#allocation5 + $0x28] sm:$0xff] %v325
          %334 = vst [vmem:[#allocation5 + $0x30] sm:$0xff] %v326
          %335 = vst [vmem:[#allocation5 + $0x38] sm:$0xff] %v327
        $region40: #{tpu_custom_call.1} parent=23 // pred_fallthru
          _
        // Predicated region
        $region41: #{tpu_custom_call.1} parent=23 // pred_check
          %p336 = pneg %p80
        $region42: #{tpu_custom_call.1} parent=23 // pred_check_branch
          %338 = sbr.rel (%p336) target = $region44
        $region43: #{tpu_custom_call.1} parent=23 // pred_region
          %s340 = ssub.s32 1024, 1024
          %341 = vsyncadd [#allocation4], %s340
          %s342 = smul.addr %s20, 8
          %s343 = smul.addr %s342, 128
          %s344 = scalar_lea.hbm %s1, %s343
          %s345 = sshll.u32 [#allocation5], 4
          %s346 = int_to_ptr.vmem [resolvable:$true] %s345
          %351 = dma.vmem_to_hbm [thread:$0]  %s346, 1024, %s344, [#allocation4], 128, 128, 8
        $region44: #{tpu_custom_call.1} parent=23 // pred_fallthru
          _
        // Predicated region
        $region45: #{tpu_custom_call.1} parent=23 // pred_check
          %p352 = pneg %p80
        $region46: #{tpu_custom_call.1} parent=23 // pred_check_branch
          %354 = sbr.rel (%p352) target = $region48
        $region47: #{tpu_custom_call.1} parent=23 // pred_region
          %355 = dma.done [#allocation4], 1024
        $region48: #{tpu_custom_call.1} parent=23 // pred_fallthru
          _
      $region24: #{tpu_custom_call.1} parent=5 // pred_fallthru
        _
      %p356 = scmp.le.s32.totalorder 2, %s11
      // Predicated region
      $region49: #{tpu_custom_call.1} parent=5 // pred_check
        %p357 = pneg %p356
      $region50: #{tpu_custom_call.1} parent=5 // pred_check_branch
        %359 = sbr.rel (%p357) target = $region52
      $region51: #{tpu_custom_call.1} parent=5 // pred_region
        %s360 = ssub.s32 %s11, 2
      $region52: #{tpu_custom_call.1} parent=5 // pred_fallthru
        _
    $region6: #{tpu_custom_call.1} parent=1 // loop_footer
      %s15 = sadd.s32 1, %s11
    $region7: #{tpu_custom_call.1} parent=1 // loop_footer_branch
      %10 = sbr.rel target = $region3
    $region8: #{tpu_custom_call.1} parent=1 // loop_exit
      _
    %361 = vsyncpa [#allocation3], 1
    %s362 = scalar_lea.sflag [#allocation3], 1
    %363 = vsyncpa %s362, 1
    %364 = vsyncpa [#allocation4], 1
    %s365 = scalar_lea.sflag [#allocation4], 1
    %366 = vsyncpa %s365, 1

</llo_original>
